<compile_context>
chip_gen: v7x
topology: tpu7x:2x2x1
jax: 0.10.0
libtpu: 0.0.40
codegen_flags: <defaults>
</compile_context>

<pallas_src>
import functools

import jax
import jax.numpy as jnp
import numpy as np
from jax.experimental import pallas as pl
from jax.experimental.pallas import tpu as pltpu


# ----------------------------------------------------------------------------
# Generation-aware tiling budget
# ----------------------------------------------------------------------------
def _tiling_budget():
    """Returns (target tile bytes, vmem_limit_bytes) per TPU generation.

    v5e/v6e: 128 MiB physical VMEM -> 4 MiB tiles, 64 MiB scoped limit.
    v7x:      64 MiB per TensorCore -> 2 MiB tiles, 36 MiB scoped limit.
    """
    try:
        vmem = int(pltpu.get_tpu_info().vmem_capacity_bytes)
    except Exception:
        vmem = 64 * 1024 * 1024            # conservative default (v7x-sized)
    if vmem >= 100 * 1024 * 1024:
        return 4 * 1024 * 1024, 64 * 1024 * 1024
    return 2 * 1024 * 1024, 36 * 1024 * 1024


def _cdiv(a, b):
    return -(-a // b)


def _plan_flat(n_elements, target_bytes):
    """Lane-dense flat tiling.  Returns (rows, width, rb, n_blocks) with
    rows * width >= n_elements, rows == rb * n_blocks, and every block
    <= ~target_bytes (never a single unbounded block)."""
    width = 128
    for w in (1024, 512, 256, 128):
        if n_elements >= w:
            width = w
            break
    rows_raw = _cdiv(n_elements, width)
    max_rb = max(8, (target_bytes // (width * 4) // 8) * 8)
    if rows_raw <= max_rb:
        return rows_raw, width, rows_raw, 1         # single block == full dims
    n_blocks = _cdiv(rows_raw, max_rb)
    rb = _cdiv(_cdiv(rows_raw, n_blocks), 8) * 8    # balanced, 8-aligned
    return n_blocks * rb, width, rb, n_blocks


def _plan_pattern(batch, seq, feat, target_bytes):
    """Per-batch disturbance-pattern tiling (avoids materializing the full
    [B,S,F] disturbance).  Returns (width, R, bb, n_blocks, B_pad) or None."""
    sf = seq * feat
    width = None
    for w in (1024, 512, 256, 128):
        if sf % w == 0 and w % feat == 0:
            width = w
            break
    if width is None:
        return None
    r = sf // width
    sample_bytes = sf * 4
    if sample_bytes > 2 * target_bytes:
        # TODO(synk): could additionally split the per-sample row axis here;
        # fall back to the flat path instead (still correct, just more HBM).
        return None
    bb = max(1, min(batch, target_bytes // sample_bytes))
    n_blocks = _cdiv(batch, bb)
    bb = _cdiv(batch, n_blocks)                     # balance block sizes
    return width, r, bb, n_blocks, n_blocks * bb


# ----------------------------------------------------------------------------
# Pallas kernel: one tile per grid step.
#   elementwise decomposition + diffusion q_sample + per-block SSE partial
#   + p>0 disturbance correction.
# ----------------------------------------------------------------------------
def _anomaly_fwd_kernel(*refs, sqrt_ab, sqrt_1mab, p):
    if p > 0.0:
        data_ref, dist_ref, noise_ref, high_ref, recon_ref, loss_ref = refs
    else:
        data_ref, noise_ref, high_ref, recon_ref, loss_ref = refs

    data = data_ref[...]
    noise = noise_ref[...]

    if p > 0.0:
        # Disturbance block is either a tiny per-batch [bb, 1, width] pattern
        # (broadcast along the S axis) or a full-size tile on the fallback
        # path; hoist a single broadcast and reuse it.
        disturb = jnp.broadcast_to(dist_ref[...], data.shape)
        x = data + disturb                 # data_disturbed
    else:
        x = data                           # p == 0: disturbance is exactly zero

    # Fallback decomposition: high_freq == low_freq == 0.5 * data_disturbed.
    high = 0.5 * x
    # Diffusion q_sample at fixed timestep t.
    noisy = sqrt_ab * x + sqrt_1mab * noise
    # Fallback denoiser / reconstruction.
    recon = noisy

    # Per-block partial sum of squared reconstruction error (single reduction:
    # denoise_loss == recon_loss and decomp_loss == 0 on the fallback path).
    d = recon - x
    partial = jnp.sum(d * d)
    loss_ref[...] = jnp.broadcast_to(partial, loss_ref.shape).astype(jnp.float32)

    # p > 0 disturbance correction, applied AFTER the losses (as in PyTorch).
    if p > 0.0:                            # static Python branch (compile-time p)
        # high / (high + low + 1e-10); low == high so the denominator is x+eps.
        ratio = high * pl.reciprocal(x + 1e-10, approx=False)
        high = high - disturb * ratio
        recon = recon - disturb

    high_ref[...] = high
    recon_ref[...] = recon


# ----------------------------------------------------------------------------
# Wrapper
# ----------------------------------------------------------------------------
def anomaly_detection_forward(data, time_feat, disturb2d, noise, *,
                              p=0.0, t=500, time_steps=1000,
                              beta_start=1e-4, beta_end=0.02,
                              tile_bytes=None):
    """Forward pass of AnomalyDetection.

    Args:
      data:      [B, S, F] float32 time series.
      time_feat: [B, S, T] float32 time features (unused on the fallback path).
      disturb2d: [B, F] float32 uniform disturbance draw (NOT yet scaled by p).
      noise:     [B, S, F] float32 gaussian noise for the diffusion step.
      tile_bytes: optional override of the per-block byte budget (testing).
    Returns: (high_freq, low_freq, recon, losses-dict)
    """
    del time_feat  # unused: Reconstruction falls back to `recon = denoised`
    B, S, F = data.shape
    N = B * S * F
    p = float(p)

    # Diffusion schedule (static hyperparameters -> baked-in constants).
    betas = np.linspace(beta_start, beta_end, time_steps, dtype=np.float64)
    alphas_cumprod = np.cumprod(1.0 - betas)
    sqrt_ab = float(np.sqrt(alphas_cumprod[t]))
    sqrt_1mab = float(np.sqrt(1.0 - alphas_cumprod[t]))

    target_bytes, vmem_limit = _tiling_budget()
    if tile_bytes is not None:
        target_bytes = int(tile_bytes)

    data_f = data.astype(jnp.float32)
    noise_f = noise.astype(jnp.float32)

    plan = _plan_pattern(B, S, F, target_bytes) if p > 0.0 else None

    if plan is not None:
        # ---- per-batch pattern path: no full-size disturbance in HBM -------
        width, R, bb, n_blocks, B_pad = plan

        def to_view(a):
            a = a.reshape(B, R, width)
            if B_pad != B:
                a = jnp.pad(a, ((0, B_pad - B), (0, 0), (0, 0)))
            return a

        data_v = to_view(data_f)
        noise_v = to_view(noise_f)
        pattern = jnp.tile(disturb2d.astype(jnp.float32) * p, (1, width // F))
        if B_pad != B:
            pattern = jnp.pad(pattern, ((0, B_pad - B), (0, 0)))
        pattern = pattern.reshape(B_pad, 1, width)

        big_spec = pl.BlockSpec((bb, R, width), lambda i: (i, 0, 0))
        pat_spec = pl.BlockSpec((bb, 1, width), lambda i: (i, 0, 0))
        inputs = [data_v, pattern, noise_v]
        in_specs = [big_spec, pat_spec, big_spec]
        big_shape = (B_pad, R, width)
        n_pad_elems = B_pad * R * width
        extra_bytes = B_pad * width * 4
    else:
        # ---- flat lane-dense path (p == 0, or awkward F with p > 0) --------
        rows, width, rb, n_blocks = _plan_flat(N, target_bytes)
        n_pad_elems = rows * width

        def to_view(a):
            flat = a.reshape(-1)
            if n_pad_elems != N:
                flat = jnp.pad(flat, (0, n_pad_elems - N))
            return flat.reshape(rows, width)

        data_v = to_view(data_f)
        noise_v = to_view(noise_f)
        big_spec = pl.BlockSpec((rb, width), lambda i: (i, 0))
        inputs = [data_v, noise_v]
        in_specs = [big_spec, big_spec]
        big_shape = (rows, width)
        extra_bytes = 0
        if p > 0.0:
            # TODO(synk): no lane-dense width compatible with this (S, F);
            # fall back to materializing the full disturbance (extra ~2N words
            # of HBM traffic on this path only).
            disturb_full = jnp.broadcast_to(
                (disturb2d.astype(jnp.float32) * p)[:, None, :], (B, S, F))
            inputs.insert(1, to_view(disturb_full))
            in_specs.insert(1, big_spec)
            extra_bytes = n_pad_elems * 4

    kernel = functools.partial(_anomaly_fwd_kernel,
                               sqrt_ab=sqrt_ab, sqrt_1mab=sqrt_1mab, p=p)

    out_shape = (
        jax.ShapeDtypeStruct(big_shape, jnp.float32),            # high (== low)
        jax.ShapeDtypeStruct(big_shape, jnp.float32),            # recon
        jax.ShapeDtypeStruct((n_blocks, 1, 128), jnp.float32),   # per-block SSE
    )
    out_specs = (
        big_spec,
        big_spec,
        pl.BlockSpec((1, 1, 128), lambda i: (i, 0, 0)),
    )

    cost = pl.CostEstimate(
        flops=(13 if p > 0.0 else 8) * n_pad_elems,
        transcendentals=0,
        bytes_accessed=4 * n_pad_elems * 4 + extra_bytes + n_blocks * 128 * 4,
    )

    high_v, recon_v, partials = pl.pallas_call(
        kernel,
        grid=(n_blocks,),
        in_specs=in_specs,
        out_specs=out_specs,
        out_shape=out_shape,
        compiler_params=pltpu.CompilerParams(
            dimension_semantics=("parallel",),    # independent blocks
            vmem_limit_bytes=vmem_limit,
        ),
        cost_estimate=cost,
    )(*inputs)

    # Loss finalization (tiny, done in plain JAX).
    inv_n = 1.0 / float(N)
    sum_sq = jnp.sum(partials[:, 0, 0])
    recon_loss = sum_sq * (inv_n * inv_n)          # mean MSE / data_points
    denoise_loss = recon_loss                      # denoised == recon (fallback)
    decomp_loss = jnp.zeros((), jnp.float32)       # high + low == data_disturbed
    total_loss = 0.3 * recon_loss + 0.3 * denoise_loss + 0.2 * decomp_loss
    # energy_loss is None on the fallback fusion path -> not added.

    if plan is not None:
        high = high_v[:B].reshape(B, S, F)
        recon = recon_v[:B].reshape(B, S, F)
    else:
        high = high_v.reshape(-1)[:N].reshape(B, S, F)
        recon = recon_v.reshape(-1)[:N].reshape(B, S, F)
    low = high                                     # identical in every code path

    losses = {"total": total_loss, "recon": recon_loss,
              "denoise": denoise_loss, "decomp": decomp_loss, "energy": None}
    return high, low, recon, losses


# ----------------------------------------------------------------------------
# Pure-JAX reference (correctness check for the kernel)
# ----------------------------------------------------------------------------
def _reference(data, disturb2d, noise, *, p, t, time_steps, beta_start, beta_end):
    B, S, F = data.shape
    betas = np.linspace(beta_start, beta_end, time_steps, dtype=np.float64)
    ab = np.cumprod(1.0 - betas)
    sab, s1ab = float(np.sqrt(ab[t])), float(np.sqrt(1.0 - ab[t]))
    disturb = jnp.broadcast_to((disturb2d * p)[:, None, :], (B, S, F)).astype(jnp.float32)
    x = data + disturb
    high = 0.5 * x
    low = 0.5 * x
    noisy = sab * x + s1ab * noise
    recon = noisy
    n = B * S * F
    recon_l = jnp.mean((recon - x) ** 2) / n
    den_l = jnp.mean((noisy - x) ** 2) / n
    dec_l = jnp.mean((high + low - x) ** 2) / n
    total = 0.3 * recon_l + 0.3 * den_l + 0.2 * dec_l
    if p > 0:
        cs = high + low + 1e-10
        high = high - disturb * (high / cs)
        low = low - disturb * (low / cs)
        recon = recon - disturb
    return high, low, recon, (total, recon_l, den_l, dec_l)


def _check(data, time_feat, disturb2d, noise, *, p, tile_bytes=None):
    high, low, recon, losses = anomaly_detection_forward(
        data, time_feat, disturb2d, noise, p=p, tile_bytes=tile_bytes)
    jax.block_until_ready((high, low, recon, losses["total"]))

    rh, rl, rr, (rt, rrl, rdl, rcl) = _reference(
        data, disturb2d, noise, p=p, t=500, time_steps=1000,
        beta_start=1e-4, beta_end=0.02)
    np.testing.assert_allclose(np.asarray(high), np.asarray(rh), rtol=1e-5, atol=1e-5)
    np.testing.assert_allclose(np.asarray(low), np.asarray(rl), rtol=1e-5, atol=1e-5)
    np.testing.assert_allclose(np.asarray(recon), np.asarray(rr), rtol=1e-5, atol=1e-5)
    np.testing.assert_allclose(float(losses["total"]), float(rt), rtol=1e-5, atol=1e-7)
    np.testing.assert_allclose(float(losses["recon"]), float(rrl), rtol=1e-5, atol=1e-7)
    np.testing.assert_allclose(float(losses["denoise"]), float(rdl), rtol=1e-5, atol=1e-7)
    np.testing.assert_allclose(float(losses["decomp"]), float(rcl), rtol=1e-5, atol=1e-7)
    assert losses["energy"] is None


if __name__ == "__main__":
    key = jax.random.PRNGKey(0)

    def make(B, S, F, T, k):
        k_data, k_time, k_dist, k_noise = jax.random.split(k, 4)
        d = jax.random.normal(k_data, (B, S, F), dtype=jnp.float32)
        tf = jax.random.normal(k_time, (B, S, T), dtype=jnp.float32)
        db = jax.random.uniform(k_dist, (B, F), dtype=jnp.float32)
        nz = jax.random.normal(k_noise, (B, S, F), dtype=jnp.float32)
        return d, tf, db, nz

    k0, k1, k2, k3, k4 = jax.random.split(key, 5)

    # Primary small case: [batch, window, features] = [2, 16, 8].
    args = make(2, 16, 8, 5, k0)
    _check(*args, p=0.1)            # disturbed path (per-batch pattern kernel)
    _check(*args, p=0.0)            # clean path (2-input kernel)

    # Awkward (non-128-divisible) shape: exercises zero padding + the
    # full-disturbance fallback path.
    args = make(3, 10, 7, 5, k1)
    _check(*args, p=0.2)
    _check(*args, p=0.0)

    # Multi-block grids (tiny tile override), batch padding, R > 1 broadcast.
    args = make(8, 64, 32, 5, k2)
    _check(*args, p=0.1, tile_bytes=4096)
    _check(*args, p=0.0, tile_bytes=4096)
    args = make(5, 32, 16, 5, k3)
    _check(*args, p=0.3, tile_bytes=4096)
    args = make(4, 128, 16, 5, k4)
    _check(*args, p=0.05, tile_bytes=16384)

    print("KERNEL_OK")
</pallas_src>

<mosaic_0001>
module attributes {stable_mosaic.version = 11 : i64} {
  func.func @_anomaly_fwd_kernel(%arg0: i32, %arg1: memref<2x1x128xf32, #tpu.memory_space<vmem>>, %arg2: memref<2x1x128xf32, #tpu.memory_space<vmem>>, %arg3: memref<2x1x128xf32, #tpu.memory_space<vmem>>, %arg4: memref<2x1x128xf32, #tpu.memory_space<vmem>>, %arg5: memref<2x1x128xf32, #tpu.memory_space<vmem>>, %arg6: memref<1x1x128xf32, #tpu.memory_space<vmem>>) attributes {dimension_semantics = [#tpu.dimension_semantics<parallel>], iteration_bounds = array<i64: 1>, scalar_prefetch = 0 : i64, scratch_operands = 0 : i64, tpu.core_type = #tpu.core_type<tc>, window_params = [{transform_indices = @transform_0, window_bounds = array<i64: 2, 1, 128>}, {transform_indices = @transform_1, window_bounds = array<i64: 2, 1, 128>}, {transform_indices = @transform_2, window_bounds = array<i64: 2, 1, 128>}, {transform_indices = @transform_3, window_bounds = array<i64: 2, 1, 128>}, {transform_indices = @transform_4, window_bounds = array<i64: 2, 1, 128>}, {transform_indices = @transform_5, window_bounds = array<i64: 1, 1, 128>}]} {
    %c0 = arith.constant 0 : index
    %c0_0 = arith.constant 0 : index
    %c0_1 = arith.constant 0 : index
    %0 = vector.load %arg1[%c0, %c0_0, %c0_1] : memref<2x1x128xf32, #tpu.memory_space<vmem>>, vector<2x1x128xf32>
    %c0_2 = arith.constant 0 : index
    %c0_3 = arith.constant 0 : index
    %c0_4 = arith.constant 0 : index
    %1 = vector.load %arg3[%c0_2, %c0_3, %c0_4] : memref<2x1x128xf32, #tpu.memory_space<vmem>>, vector<2x1x128xf32>
    %c0_5 = arith.constant 0 : index
    %c0_6 = arith.constant 0 : index
    %c0_7 = arith.constant 0 : index
    %2 = vector.load %arg2[%c0_5, %c0_6, %c0_7] : memref<2x1x128xf32, #tpu.memory_space<vmem>>, vector<2x1x128xf32>
    %3 = arith.addf %0, %2 : vector<2x1x128xf32>
    %cst = arith.constant 5.000000e-01 : f32
    %4 = vector.broadcast %cst : f32 to vector<2x1x128xf32>
    %5 = arith.mulf %4, %3 : vector<2x1x128xf32>
    %cst_8 = arith.constant 0.278920531 : f32
    %6 = vector.broadcast %cst_8 : f32 to vector<2x1x128xf32>
    %7 = arith.mulf %6, %3 : vector<2x1x128xf32>
    %cst_9 = arith.constant 0.960314214 : f32
    %8 = vector.broadcast %cst_9 : f32 to vector<2x1x128xf32>
    %9 = arith.mulf %8, %1 : vector<2x1x128xf32>
    %10 = arith.addf %7, %9 : vector<2x1x128xf32>
    %11 = arith.subf %10, %3 : vector<2x1x128xf32>
    %12 = arith.mulf %11, %11 : vector<2x1x128xf32>
    %13 = vector.shape_cast %12 : vector<2x1x128xf32> to vector<1x2x1x128xf32>
    %cst_10 = arith.constant dense<0.000000e+00> : vector<1xf32>
    %14 = vector.multi_reduction <add>, %13, %cst_10 [1, 2, 3] : vector<1x2x1x128xf32> to vector<1xf32>
    %15 = vector.shape_cast %14 : vector<1xf32> to vector<1x1x1x1xf32>
    %16 = vector.extract %15[0, 0, 0, 0] : f32 from vector<1x1x1x1xf32>
    %17 = vector.broadcast %16 : f32 to vector<1x1x128xf32>
    %c0_11 = arith.constant 0 : index
    %c0_12 = arith.constant 0 : index
    %c0_13 = arith.constant 0 : index
    %18 = vector.load %arg6[%c0_11, %c0_12, %c0_13] : memref<1x1x128xf32, #tpu.memory_space<vmem>>, vector<1x1x128xf32>
    tpu.vector_store %arg6[%c0_11, %c0_12, %c0_13], %17 {strides = array<i32>} : memref<1x1x128xf32, #tpu.memory_space<vmem>>, vector<1x1x128xf32>,
    %cst_14 = arith.constant 1.000000e-10 : f32
    %19 = vector.broadcast %cst_14 : f32 to vector<2x1x128xf32>
    %20 = arith.addf %3, %19 : vector<2x1x128xf32>
    %21 = tpu.reciprocal %20 : vector<2x1x128xf32> -> vector<2x1x128xf32>
    %22 = arith.mulf %5, %21 : vector<2x1x128xf32>
    %23 = arith.mulf %2, %22 : vector<2x1x128xf32>
    %24 = arith.subf %5, %23 : vector<2x1x128xf32>
    %25 = arith.subf %10, %2 : vector<2x1x128xf32>
    %c0_15 = arith.constant 0 : index
    %c0_16 = arith.constant 0 : index
    %c0_17 = arith.constant 0 : index
    %26 = vector.load %arg4[%c0_15, %c0_16, %c0_17] : memref<2x1x128xf32, #tpu.memory_space<vmem>>, vector<2x1x128xf32>
    tpu.vector_store %arg4[%c0_15, %c0_16, %c0_17], %24 {strides = array<i32>} : memref<2x1x128xf32, #tpu.memory_space<vmem>>, vector<2x1x128xf32>,
    %c0_18 = arith.constant 0 : index
    %c0_19 = arith.constant 0 : index
    %c0_20 = arith.constant 0 : index
    %27 = vector.load %arg5[%c0_18, %c0_19, %c0_20] : memref<2x1x128xf32, #tpu.memory_space<vmem>>, vector<2x1x128xf32>
    tpu.vector_store %arg5[%c0_18, %c0_19, %c0_20], %25 {strides = array<i32>} : memref<2x1x128xf32, #tpu.memory_space<vmem>>, vector<2x1x128xf32>,
    return
  }
  func.func @transform_0(%arg0: i32) -> (i32, i32, i32) {
    %c0_i32 = arith.constant 0 : i32
    %c0_i32_0 = arith.constant 0 : i32
    %c0_i32_1 = arith.constant 0 : i32
    return %arg0, %c0_i32, %c0_i32_0 : i32, i32, i32
  }
  func.func @transform_1(%arg0: i32) -> (i32, i32, i32) {
    %c0_i32 = arith.constant 0 : i32
    %c0_i32_0 = arith.constant 0 : i32
    %c0_i32_1 = arith.constant 0 : i32
    return %arg0, %c0_i32, %c0_i32_0 : i32, i32, i32
  }
  func.func @transform_2(%arg0: i32) -> (i32, i32, i32) {
    %c0_i32 = arith.constant 0 : i32
    %c0_i32_0 = arith.constant 0 : i32
    %c0_i32_1 = arith.constant 0 : i32
    return %arg0, %c0_i32, %c0_i32_0 : i32, i32, i32
  }
  func.func @transform_3(%arg0: i32) -> (i32, i32, i32) {
    %c0_i32 = arith.constant 0 : i32
    %c0_i32_0 = arith.constant 0 : i32
    %c0_i32_1 = arith.constant 0 : i32
    return %arg0, %c0_i32, %c0_i32_0 : i32, i32, i32
  }
  func.func @transform_4(%arg0: i32) -> (i32, i32, i32) {
    %c0_i32 = arith.constant 0 : i32
    %c0_i32_0 = arith.constant 0 : i32
    %c0_i32_1 = arith.constant 0 : i32
    return %arg0, %c0_i32, %c0_i32_0 : i32, i32, i32
  }
  func.func @transform_5(%arg0: i32) -> (i32, i32, i32) {
    %c0_i32 = arith.constant 0 : i32
    %c0_i32_0 = arith.constant 0 : i32
    %c0_i32_1 = arith.constant 0 : i32
    return %arg0, %c0_i32, %c0_i32_0 : i32, i32, i32
  }
}

</mosaic_0001>

<llo_original>
// kernel: tpu_custom_call.1
$region0: #{tpu_custom_call.1}
  #allocation0 [shape = 'u32[]', space=smem, size = 0x4, offset = 0x4, fixed_abs, tag = 'smem constant byte address 0x4 - core index']
  #allocation1 [shape = 'u32[144,128]{1,0:T(1,128)}', space=vmem, size = 0x12000, scoped, tag = 'internal scratch']
  %s0 = inlined_call_operand.hbm [shape: f32[2,1,128], index: 0, kind: input, shape index: {}]
  %s1 = inlined_call_operand.vmem [shape: f32[2,1,128], index: 1, kind: input, shape index: {}]
  %s2 = inlined_call_operand.vmem [shape: f32[2,1,128], index: 2, kind: input, shape index: {}]
  %s3 = inlined_call_operand.hbm [shape: f32[2,1,128], index: 3, kind: output, shape index: {0}]
  %s4 = inlined_call_operand.hbm [shape: f32[2,1,128], index: 4, kind: output, shape index: {1}]
  %s5 = inlined_call_operand.hbm [shape: f32[1,1,128], index: 5, kind: output, shape index: {2}]
  %6 = xla_tuple %s3, %s4, %s5
  %s7 = sld [smem:[#allocation0]]
  $region42: #{tpu_custom_call.1} parent=0
    _
  %s9 = ssub.s32 1, %s7
  %s10 = scalar_select 0, %s9, %s7
  $region1: #{tpu_custom_call.1} parent=0
    #allocation2 [shape = 'u8[1024]{0}', space=vmem, size = 0x400, scoped, tag = 'input window, operand 0, single buffered']
    #allocation3 [shape = 's32[1]{0}', space=sflag, size = 0x4, scoped, tag = 'scoped memory for tpu_custom_call.1']
    #allocation4 [shape = 's32[1]{0}', space=sflag, size = 0x4, scoped, tag = 'scoped memory for tpu_custom_call.1']
    #allocation5 [shape = 'u8[1024]{0}', space=vmem, size = 0x400, scoped, tag = 'output window, operand 0, single buffered']
    #allocation6 [shape = 'u8[1024]{0}', space=vmem, size = 0x400, scoped, tag = 'output window, operand 1, single buffered']
    #allocation7 [shape = 's32[1]{0}', space=sflag, size = 0x4, scoped, tag = 'scoped memory for tpu_custom_call.1']
    #allocation8 [shape = 'u8[512]{0}', space=vmem, size = 0x400, scoped, tag = 'output window, operand 2, single buffered']
    %11 = vsyncpa [#allocation3], 0
    %12 = vsyncpa [#allocation4], 0
    %13 = vsyncpa [#allocation7], 0
    // Predicated region
    $region2: #{tpu_custom_call.1} parent=1 // pred_check
      _
    $region3: #{tpu_custom_call.1} parent=1 // pred_check_branch
      %15 = sbr.rel (0) target = $region5
    $region4: #{tpu_custom_call.1} parent=1 // pred_region
      %s17 = ssub.s32 32, 32
      %18 = vsyncadd [#allocation3], %s17
      %s19 = sshll.u32 [#allocation2], 4
      %s20 = int_to_ptr.vmem [resolvable:$true] %s19
      %25 = dma.hbm_to_vmem [thread:$0]  %s0, 32, %s20, [#allocation3], 16, 16, 1
    $region5: #{tpu_custom_call.1} parent=1 // pred_fallthru
      _
    // Predicated region
    $region6: #{tpu_custom_call.1} parent=1 // pred_check
      _
    $region7: #{tpu_custom_call.1} parent=1 // pred_check_branch
      %27 = sbr.rel (0) target = $region9
    $region8: #{tpu_custom_call.1} parent=1 // pred_region
      _
    $region9: #{tpu_custom_call.1} parent=1 // pred_fallthru
      _
    // Predicated region
    $region10: #{tpu_custom_call.1} parent=1 // pred_check
      _
    $region11: #{tpu_custom_call.1} parent=1 // pred_check_branch
      %29 = sbr.rel (0) target = $region13
    $region12: #{tpu_custom_call.1} parent=1 // pred_region
      _
    $region13: #{tpu_custom_call.1} parent=1 // pred_fallthru
      _
    // Predicated region
    $region14: #{tpu_custom_call.1} parent=1 // pred_check
      _
    $region15: #{tpu_custom_call.1} parent=1 // pred_check_branch
      %31 = sbr.rel (0) target = $region17
    $region16: #{tpu_custom_call.1} parent=1 // pred_region
      %32 = dma.done [#allocation3], 32
    $region17: #{tpu_custom_call.1} parent=1 // pred_fallthru
      _
    %v33 = vld [vmem:[#allocation2] sm:$0x1]
    %v34 = vld [vmem:[#allocation2 + $0x1] sm:$0x1]
    %v35 = vld [vmem:[%s2] sm:$0x1]
    %v36 = vld [vmem:[%s2 + $0x1] sm:$0x1]
    %v37 = vld [vmem:[%s1] sm:$0x1]
    %v38 = vld [vmem:[%s1 + $0x1] sm:$0x1]
    %v39 = vadd.f32 %v33, %v37
    %v40 = vadd.f32 %v34, %v38
    %v41 = vmul.f32 %v39, 0.5
    %v42 = vmul.f32 %v40, 0.5
    %v43 = vmul.f32 %v39, 0.27892053
    %v44 = vmul.f32 %v40, 0.27892053
    %v45 = vmul.f32 %v35, 0.9603142
    %v46 = vmul.f32 %v36, 0.9603142
    %v47 = vadd.f32 %v43, %v45
    %v48 = vadd.f32 %v44, %v46
    %v49 = vsub.f32 %v47, %v39
    %v50 = vsub.f32 %v48, %v40
    %v51 = vmul.f32 %v49, %v49
    %v52 = vmul.f32 %v50, %v50
    %vm53 = vcmask 1040384
    %v54 = vsel %vm53, %v51, 0.0
    %v55 = vsel %vm53, %v52, 0.0
    %v56 = vadd.f32 %v54, %v55
    %57 = vadd.xlane.f32.xlu0 %v56
    %v58 = vpop.xlane.xlu0 %57
    %v59 = vrot.slane %v58, 4
    %v60 = vadd.f32 %v58, %v59
    %v61 = vrot.slane %v60, 2
    %v62 = vadd.f32 %v60, %v61
    %v63 = vrot.slane %v62, 1
    %v64 = vadd.f32 %v62, %v63
    %s65 = vtos %v64
    %v66 = vstv %s65
    %67 = vst [vmem:[#allocation8] sm:$0x1] %v66
    %v68 = vadd.f32 %v39, 1e-10
    %v69 = vadd.f32 %v40, 1e-10
    %v70 = vrcp.pop %v68
    %v71 = vrcp.pop %v69
    %v72 = vmul.f32 %v41, %v70
    %v73 = vmul.f32 %v42, %v71
    %v74 = vmul.f32 %v37, %v72
    %v75 = vmul.f32 %v38, %v73
    %v76 = vsub.f32 %v41, %v74
    %v77 = vsub.f32 %v42, %v75
    %v78 = vsub.f32 %v47, %v37
    %v79 = vsub.f32 %v48, %v38
    %80 = vst [vmem:[#allocation5] sm:$0x1] %v76
    %81 = vst [vmem:[#allocation5 + $0x1] sm:$0x1] %v77
    %82 = vst [vmem:[#allocation6] sm:$0x1] %v78
    %83 = vst [vmem:[#allocation6 + $0x1] sm:$0x1] %v79
    // Predicated region
    $region18: #{tpu_custom_call.1} parent=1 // pred_check
      _
    $region19: #{tpu_custom_call.1} parent=1 // pred_check_branch
      %85 = sbr.rel (0) target = $region21
    $region20: #{tpu_custom_call.1} parent=1 // pred_region
      %s87 = ssub.s32 32, 32
      %88 = vsyncadd [#allocation4], %s87
      %s89 = sshll.u32 [#allocation5], 4
      %s90 = int_to_ptr.vmem [resolvable:$true] %s89
      %95 = dma.vmem_to_hbm [thread:$0]  %s90, 32, %s3, [#allocation4], 16, 16, 1
    $region21: #{tpu_custom_call.1} parent=1 // pred_fallthru
      _
    // Predicated region
    $region22: #{tpu_custom_call.1} parent=1 // pred_check
      _
    $region23: #{tpu_custom_call.1} parent=1 // pred_check_branch
      %97 = sbr.rel (0) target = $region25
    $region24: #{tpu_custom_call.1} parent=1 // pred_region
      %s99 = ssub.s32 32, 32
      %100 = vsyncadd [#allocation7], %s99
      %s101 = sshll.u32 [#allocation6], 4
      %s102 = int_to_ptr.vmem [resolvable:$true] %s101
      %107 = dma.vmem_to_hbm [thread:$0]  %s102, 32, %s4, [#allocation7], 16, 16, 1
    $region25: #{tpu_custom_call.1} parent=1 // pred_fallthru
      _
    // Predicated region
    $region26: #{tpu_custom_call.1} parent=1 // pred_check
      _
    $region27: #{tpu_custom_call.1} parent=1 // pred_check_branch
      %109 = sbr.rel (0) target = $region29
    $region28: #{tpu_custom_call.1} parent=1 // pred_region
      %s111 = ssub.s32 16, 16
      %112 = vsyncadd [#allocation7], %s111
      %s114 = sshll.u32 [#allocation8], 4
      %s115 = int_to_ptr.vmem [resolvable:$true] %s114
      %117 = dma.vmem_to_hbm [thread:$0]  %s115, 16, %s5, [#allocation7]
    $region29: #{tpu_custom_call.1} parent=1 // pred_fallthru
      _
    // Predicated region
    $region30: #{tpu_custom_call.1} parent=1 // pred_check
      _
    $region31: #{tpu_custom_call.1} parent=1 // pred_check_branch
      %119 = sbr.rel (0) target = $region33
    $region32: #{tpu_custom_call.1} parent=1 // pred_region
      %120 = dma.done [#allocation4], 32
    $region33: #{tpu_custom_call.1} parent=1 // pred_fallthru
      _
    // Predicated region
    $region34: #{tpu_custom_call.1} parent=1 // pred_check
      _
    $region35: #{tpu_custom_call.1} parent=1 // pred_check_branch
      %122 = sbr.rel (0) target = $region37
    $region36: #{tpu_custom_call.1} parent=1 // pred_region
      %123 = dma.done [#allocation7], 32
    $region37: #{tpu_custom_call.1} parent=1 // pred_fallthru
      _
    // Predicated region
    $region38: #{tpu_custom_call.1} parent=1 // pred_check
      _
    $region39: #{tpu_custom_call.1} parent=1 // pred_check_branch
      %125 = sbr.rel (0) target = $region41
    $region40: #{tpu_custom_call.1} parent=1 // pred_region
      %126 = dma.done [#allocation7], 16
    $region41: #{tpu_custom_call.1} parent=1 // pred_fallthru
      _
    %127 = vsyncpa [#allocation3], 1
    %128 = vsyncpa [#allocation4], 1
    %129 = vsyncpa [#allocation7], 1

</llo_original>
